<compile_context>
chip_gen: v7x
topology: tpu7x:2x2x1
jax: 0.10.0
libtpu: 0.0.40
codegen_flags: <defaults>
</compile_context>

<pallas_src>
import jax
import jax.numpy as jnp
from jax.experimental import pallas as pl
from jax.experimental.pallas import tpu as pltpu

EPS = 1e-5
FEAT = 10  # nn.LayerNorm(10)


def layernorm_kernel(x_ref, gamma_ref, beta_ref, o_ref):
    # x_ref: (FEAT, block_cols) -- features on sublanes, rows on lanes.
    # gamma_ref / beta_ref: (FEAT, 1) columns, broadcast across lanes.
    x = x_ref[...].astype(jnp.float32)
    mean = jnp.mean(x, axis=0, keepdims=True)            # (1, C)
    centered = x - mean
    # PyTorch LayerNorm uses the biased variance (divide by N).
    var = jnp.mean(centered * centered, axis=0, keepdims=True)
    inv = jax.lax.rsqrt(var + EPS)                        # (1, C)
    # Fold the affine scale into the rsqrt factor once per tile.
    scale = inv * gamma_ref[...]                          # (FEAT, C)
    o_ref[...] = (centered * scale + beta_ref[...]).astype(o_ref.dtype)


def layernorm_pallas(x, gamma, beta, *, block_cols=16384):
    """x: (..., FEAT) float32.  Returns LayerNorm(x) over the last dim."""
    orig_shape = x.shape
    assert orig_shape[-1] == FEAT
    x2 = x.reshape(-1, FEAT)
    n_rows = x2.shape[0]

    # Lane-dense layout: (FEAT, n_rows) with rows on the 128-lane axis.
    xt = x2.T

    # Block width: multiple of 128, capped by the (padded) problem size so
    # tiny inputs launch a single-block grid.
    bc = min(block_cols, ((n_rows + 127) // 128) * 128)
    bc = max(bc, 128)
    n_pad = pl.cdiv(n_rows, bc) * bc
    if n_pad != n_rows:
        # Zero-padded columns normalize harmlessly (var=0 -> rsqrt(eps)); they
        # are sliced off below.
        xt = jnp.pad(xt, ((0, 0), (0, n_pad - n_rows)))

    gamma_c = gamma.reshape(FEAT, 1).astype(jnp.float32)
    beta_c = beta.reshape(FEAT, 1).astype(jnp.float32)

    grid = (n_pad // bc,)
    out_t = pl.pallas_call(
        layernorm_kernel,
        out_shape=jax.ShapeDtypeStruct((FEAT, n_pad), x2.dtype),
        grid_spec=pltpu.PrefetchScalarGridSpec(
            num_scalar_prefetch=0,
            grid=grid,
            in_specs=[
                pl.BlockSpec((FEAT, bc), lambda i: (0, i)),
                pl.BlockSpec((FEAT, 1), lambda i: (0, 0)),
                pl.BlockSpec((FEAT, 1), lambda i: (0, 0)),
            ],
            out_specs=pl.BlockSpec((FEAT, bc), lambda i: (0, i)),
        ),
        compiler_params=pltpu.CompilerParams(
            dimension_semantics=("parallel",)
        ),
    )(xt, gamma_c, beta_c)

    return out_t[:, :n_rows].T.reshape(orig_shape)


def _reference(x, gamma, beta):
    mean = jnp.mean(x, axis=-1, keepdims=True)
    var = jnp.mean((x - mean) ** 2, axis=-1, keepdims=True)
    return (x - mean) / jnp.sqrt(var + EPS) * gamma + beta


if __name__ == "__main__":
    key = jax.random.PRNGKey(0)

    # Deterministic affine params (PyTorch default weight=1/bias=0; perturbed
    # so the affine path is actually exercised).
    gamma = jnp.linspace(0.5, 1.5, FEAT, dtype=jnp.float32)
    beta = jnp.linspace(-0.1, 0.1, FEAT, dtype=jnp.float32)

    # Small shape consistent with the module: (batch, seq, 10).
    B, S = 2, 8
    x = jax.random.normal(key, (B, S, FEAT), dtype=jnp.float32)
    y = layernorm_pallas(x, gamma, beta)
    jax.block_until_ready(y)
    assert jnp.allclose(y, _reference(x, gamma, beta), atol=1e-5, rtol=1e-5), \
        "mismatch vs reference (small case)"

    # Ragged, multi-block case: rows not a multiple of the block width, forced
    # small block to exercise padding + a multi-step grid.
    key2 = jax.random.PRNGKey(1)
    x2 = jax.random.normal(key2, (3, 1000, FEAT), dtype=jnp.float32)
    y2 = layernorm_pallas(x2, gamma, beta, block_cols=256)
    jax.block_until_ready(y2)
    assert jnp.allclose(y2, _reference(x2, gamma, beta), atol=1e-5, rtol=1e-5), \
        "mismatch vs reference (ragged case)"

    # TODO(synk): quantize()/quantize_forward()/freeze()/quantize_inference()
    # (QLayerNorm) are not part of forward() and are not implemented here.
    print("KERNEL_OK")
</pallas_src>

<mosaic_0001>
module attributes {stable_mosaic.version = 11 : i64} {
  func.func @layernorm_kernel(%arg0: i32, %arg1: memref<10x128xf32, #tpu.memory_space<vmem>>, %arg2: memref<10x1xf32, #tpu.memory_space<vmem>>, %arg3: memref<10x1xf32, #tpu.memory_space<vmem>>, %arg4: memref<10x128xf32, #tpu.memory_space<vmem>>) attributes {dimension_semantics = [#tpu.dimension_semantics<parallel>], iteration_bounds = array<i64: 1>, scalar_prefetch = 0 : i64, scratch_operands = 0 : i64, tpu.core_type = #tpu.core_type<tc>, window_params = [{transform_indices = @transform_0, window_bounds = array<i64: 10, 128>}, {pipeline_mode = #tpu.pipeline_mode<synchronous>, transform_indices = @transform_1, window_bounds = array<i64: 10, 1>}, {pipeline_mode = #tpu.pipeline_mode<synchronous>, transform_indices = @transform_2, window_bounds = array<i64: 10, 1>}, {transform_indices = @transform_3, window_bounds = array<i64: 10, 128>}]} {
    %c0 = arith.constant 0 : index
    %c0_0 = arith.constant 0 : index
    %0 = vector.load %arg1[%c0, %c0_0] : memref<10x128xf32, #tpu.memory_space<vmem>>, vector<10x128xf32>
    %cst = arith.constant dense<0.000000e+00> : vector<128xf32>
    %1 = vector.multi_reduction <add>, %0, %cst [0] : vector<10x128xf32> to vector<128xf32>
    %2 = vector.shape_cast %1 : vector<128xf32> to vector<1x128xf32>
    %cst_1 = arith.constant 1.000000e+01 : f32
    %3 = vector.broadcast %cst_1 : f32 to vector<1x128xf32>
    %4 = arith.divf %2, %3 : vector<1x128xf32>
    %5 = vector.broadcast %4 : vector<1x128xf32> to vector<10x128xf32>
    %6 = arith.subf %0, %5 : vector<10x128xf32>
    %7 = arith.mulf %6, %6 : vector<10x128xf32>
    %cst_2 = arith.constant dense<0.000000e+00> : vector<128xf32>
    %8 = vector.multi_reduction <add>, %7, %cst_2 [0] : vector<10x128xf32> to vector<128xf32>
    %9 = vector.shape_cast %8 : vector<128xf32> to vector<1x128xf32>
    %cst_3 = arith.constant 1.000000e+01 : f32
    %10 = vector.broadcast %cst_3 : f32 to vector<1x128xf32>
    %11 = arith.divf %9, %10 : vector<1x128xf32>
    %cst_4 = arith.constant 9.99999974E-6 : f32
    %12 = vector.broadcast %cst_4 : f32 to vector<1x128xf32>
    %13 = arith.addf %11, %12 : vector<1x128xf32>
    %14 = math.rsqrt %13 : vector<1x128xf32>
    %c0_5 = arith.constant 0 : index
    %c0_6 = arith.constant 0 : index
    %15 = vector.load %arg2[%c0_5, %c0_6] : memref<10x1xf32, #tpu.memory_space<vmem>>, vector<10x1xf32>
    %16 = vector.broadcast %14 : vector<1x128xf32> to vector<10x128xf32>
    %17 = vector.broadcast %15 : vector<10x1xf32> to vector<10x128xf32>
    %18 = arith.mulf %16, %17 : vector<10x128xf32>
    %19 = arith.mulf %6, %18 : vector<10x128xf32>
    %c0_7 = arith.constant 0 : index
    %c0_8 = arith.constant 0 : index
    %20 = vector.load %arg3[%c0_7, %c0_8] : memref<10x1xf32, #tpu.memory_space<vmem>>, vector<10x1xf32>
    %21 = vector.broadcast %20 : vector<10x1xf32> to vector<10x128xf32>
    %22 = arith.addf %19, %21 : vector<10x128xf32>
    %c0_9 = arith.constant 0 : index
    %c0_10 = arith.constant 0 : index
    %23 = vector.load %arg4[%c0_9, %c0_10] : memref<10x128xf32, #tpu.memory_space<vmem>>, vector<10x128xf32>
    tpu.vector_store %arg4[%c0_9, %c0_10], %22 {strides = array<i32>} : memref<10x128xf32, #tpu.memory_space<vmem>>, vector<10x128xf32>,
    return
  }
  func.func @transform_0(%arg0: i32) -> (i32, i32) {
    %c0_i32 = arith.constant 0 : i32
    %c0_i32_0 = arith.constant 0 : i32
    return %c0_i32, %arg0 : i32, i32
  }
  func.func @transform_1(%arg0: i32) -> (i32, i32) {
    %c0_i32 = arith.constant 0 : i32
    %c0_i32_0 = arith.constant 0 : i32
    %c0_i32_1 = arith.constant 0 : i32
    return %c0_i32, %c0_i32_0 : i32, i32
  }
  func.func @transform_2(%arg0: i32) -> (i32, i32) {
    %c0_i32 = arith.constant 0 : i32
    %c0_i32_0 = arith.constant 0 : i32
    %c0_i32_1 = arith.constant 0 : i32
    return %c0_i32, %c0_i32_0 : i32, i32
  }
  func.func @transform_3(%arg0: i32) -> (i32, i32) {
    %c0_i32 = arith.constant 0 : i32
    %c0_i32_0 = arith.constant 0 : i32
    return %c0_i32, %arg0 : i32, i32
  }
}

</mosaic_0001>

<llo_original>
// kernel: tpu_custom_call.1
$region0: #{tpu_custom_call.1}
  #allocation0 [shape = 'u32[]', space=smem, size = 0x4, offset = 0x4, fixed_abs, tag = 'smem constant byte address 0x4 - core index']
  #allocation1 [shape = 'u32[144,128]{1,0:T(1,128)}', space=vmem, size = 0x12000, scoped, tag = 'internal scratch']
  %s0 = inlined_call_operand.vmem [shape: f32[10,128], index: 0, kind: input, shape index: {}]
  %s1 = inlined_call_operand.vmem [shape: f32[10,1], index: 1, kind: input, shape index: {}]
  %s2 = inlined_call_operand.vmem [shape: f32[10,1], index: 2, kind: input, shape index: {}]
  %s3 = inlined_call_operand.hbm [shape: f32[10,128], index: 3, kind: output, shape index: {}]
  %s4 = sld [smem:[#allocation0]]
  $region22: #{tpu_custom_call.1} parent=0
    _
  %s6 = ssub.s32 1, %s4
  %s7 = scalar_select 0, %s6, %s4
  $region1: #{tpu_custom_call.1} parent=0
    #allocation2 [shape = 'u8[8192]{0}', space=vmem, size = 0x2000, scoped, tag = 'output window, operand 0, single buffered']
    #allocation3 [shape = 's32[1]{0}', space=sflag, size = 0x4, scoped, tag = 'scoped memory for tpu_custom_call.1']
    %8 = vsyncpa [#allocation3], 0
    // Predicated region
    $region2: #{tpu_custom_call.1} parent=1 // pred_check
      _
    $region3: #{tpu_custom_call.1} parent=1 // pred_check_branch
      %10 = sbr.rel (0) target = $region5
    $region4: #{tpu_custom_call.1} parent=1 // pred_region
      _
    $region5: #{tpu_custom_call.1} parent=1 // pred_fallthru
      _
    // Predicated region
    $region6: #{tpu_custom_call.1} parent=1 // pred_check
      _
    $region7: #{tpu_custom_call.1} parent=1 // pred_check_branch
      %12 = sbr.rel (0) target = $region9
    $region8: #{tpu_custom_call.1} parent=1 // pred_region
      _
    $region9: #{tpu_custom_call.1} parent=1 // pred_fallthru
      _
    // Predicated region
    $region10: #{tpu_custom_call.1} parent=1 // pred_check
      _
    $region11: #{tpu_custom_call.1} parent=1 // pred_check_branch
      %14 = sbr.rel (0) target = $region13
    $region12: #{tpu_custom_call.1} parent=1 // pred_region
      _
    $region13: #{tpu_custom_call.1} parent=1 // pred_fallthru
      _
    %v15 = vld [vmem:[%s0] sm:$0xff]
    %v16 = vld [vmem:[%s0 + $0x8] sm:$0x3]
    %vm17 = vcmask 1041408
    %v18 = vsel %vm17, %v16, 0.0
    %v19 = vadd.f32 %v15, %v18
    %v20 = vrot.slane %v19, 4
    %v21 = vadd.f32 %v19, %v20
    %v22 = vrot.slane %v21, 2
    %v23 = vadd.f32 %v21, %v22
    %v24 = vrot.slane %v23, 1
    %v25 = vadd.f32 %v23, %v24
    %v26 = vrcp.pop 10.0
    %v27 = vmul.f32 %v25, %v26
    %v28 = vsub.f32 %v15, %v27
    %v29 = vsub.f32 %v16, %v27
    %v30 = vmul.f32 %v28, %v28
    %v31 = vmul.f32 %v29, %v29
    %v32 = vsel %vm17, %v31, 0.0
    %v33 = vadd.f32 %v30, %v32
    %v34 = vrot.slane %v33, 4
    %v35 = vadd.f32 %v33, %v34
    %v36 = vrot.slane %v35, 2
    %v37 = vadd.f32 %v35, %v36
    %v38 = vrot.slane %v37, 1
    %v39 = vadd.f32 %v37, %v38
    %v40 = vmul.f32 %v39, %v26
    %v41 = vadd.f32 %v40, 1e-05
    %v42 = vrsqrt.pop %v41
    %v43 = vld [vmem:[%s1] sm:$0xff]
    %v44 = vld [vmem:[%s1 + $0x8] sm:$0x3]
    %46 = vset.pattern.permute.xlu0 0
    %47 = vperm.xlu0 %46, %v43
    %v48 = vpop.permute.xlu0 %47
    %51 = vset.pattern.permute.xlu0 0
    %52 = vperm.xlu0 %51, %v44
    %v53 = vpop.permute.xlu0 %52
    %v55 = vmul.f32 %v42, %v48
    %v56 = vmul.f32 %v42, %v53
    %v57 = vmul.f32 %v28, %v55
    %v58 = vmul.f32 %v29, %v56
    %v59 = vld [vmem:[%s2] sm:$0xff]
    %v60 = vld [vmem:[%s2 + $0x8] sm:$0x3]
    %62 = vset.pattern.permute.xlu0 0
    %63 = vperm.xlu0 %62, %v59
    %v64 = vpop.permute.xlu0 %63
    %67 = vset.pattern.permute.xlu0 0
    %68 = vperm.xlu0 %67, %v60
    %v69 = vpop.permute.xlu0 %68
    %v71 = vadd.f32 %v57, %v64
    %v72 = vadd.f32 %v58, %v69
    %73 = vst [vmem:[#allocation2] sm:$0xff] %v71
    %74 = vst [vmem:[#allocation2 + $0x8] sm:$0x3] %v72
    // Predicated region
    $region14: #{tpu_custom_call.1} parent=1 // pred_check
      _
    $region15: #{tpu_custom_call.1} parent=1 // pred_check_branch
      %76 = sbr.rel (0) target = $region17
    $region16: #{tpu_custom_call.1} parent=1 // pred_region
      %s78 = ssub.s32 256, 256
      %79 = vsyncadd [#allocation3], %s78
      %s80 = sshll.u32 [#allocation2], 4
      %s81 = int_to_ptr.vmem [resolvable:$true] %s80
      %86 = dma.vmem_to_hbm [thread:$0]  %s81, 256, %s3, [#allocation3], 128, 128, 8
    $region17: #{tpu_custom_call.1} parent=1 // pred_fallthru
      _
    // Predicated region
    $region18: #{tpu_custom_call.1} parent=1 // pred_check
      _
    $region19: #{tpu_custom_call.1} parent=1 // pred_check_branch
      %88 = sbr.rel (0) target = $region21
    $region20: #{tpu_custom_call.1} parent=1 // pred_region
      %89 = dma.done [#allocation3], 256
    $region21: #{tpu_custom_call.1} parent=1 // pred_fallthru
      _
    %90 = vsyncpa [#allocation3], 1

</llo_original>
